<compile_context>
chip_gen: v6e
topology: v6e:2x2x1
jax: 0.10.0
libtpu: 0.0.40
codegen_flags: <defaults>
</compile_context>

<pallas_src>
import numpy as np

import jax
import jax.numpy as jnp
from jax import lax
from jax.experimental import pallas as pl
from jax.experimental.pallas import tpu as pltpu

# Module hyperparameters (globals in the original GPT-lite script)
N_EMBD = 32      # n_embd  (C)
BLOCK_SIZE = 8   # block_size (max T)
HEAD_SIZE = 16   # head_size
DROPOUT = 0.0    # dropout prob

LANE = 128       # TPU lane width; each K/Q/V weight block is padded to this.


def _head_kernel(x_ref, wqkv_ref, bias_ref, o_ref):
    # x_ref:    (B*T, C)       all batch elements folded into rows
    # wqkv_ref: (C, 3*LANE)    [Wk.T | scale*Wq.T | Wv.T], each block zero-padded
    #                          to 128 lanes (lane-aligned, zero-cost slices)
    # bias_ref: (B*T, B*T)     0 where attention allowed, -1e30 where masked
    #                          (block-diagonal causal, built statically)
    # o_ref:    (B*T, LANE)    first H columns hold the result (lane-dense store)
    x = x_ref[...]

    # One fused MXU push for all three projections (scale already folded into q).
    qkv = jnp.dot(x, wqkv_ref[...], preferred_element_type=jnp.float32)
    k = qkv[:, 0 * LANE:1 * LANE]
    q = qkv[:, 1 * LANE:2 * LANE]
    v = qkv[:, 2 * LANE:3 * LANE]

    # scores = q @ k.T without materializing a transpose: contract last dims.
    # Zero-padded lanes contribute nothing to the contraction.
    wei = lax.dot_general(q, k, (((1,), (1,)), ((), ())),
                          preferred_element_type=jnp.float32)      # (BT, BT)

    # Static block-diagonal causal mask as an additive bias (no iota/div/mod).
    wei = wei + bias_ref[...]

    # Numerically-stable softmax, exact normalization.
    wei_max = jnp.max(wei, axis=-1, keepdims=True)
    p = jnp.exp(wei - wei_max)
    denom = jnp.sum(p, axis=-1, keepdims=True)
    wei = p / denom

    # dropout: identity (eval mode / p = 0)

    # (BT, LANE) result -> single unmasked lane-dense store.
    o_ref[...] = jnp.dot(wei, v,
                         preferred_element_type=jnp.float32).astype(o_ref.dtype)


def megatron_head_forward(x, w_key, w_query, w_value):
    """x: (B, T, C) float32; weights: (H, C) each (nn.Linear layout). -> (B, T, H)."""
    B, T, C = x.shape
    H = w_key.shape[0]
    BT = B * T

    # ---- wrapper-side layout plumbing (one-time, outside the kernel) ----
    x2d = x.reshape(BT, C)

    # Fused, pre-transposed, lane-padded projection weight (C, 3*128).
    # Score scale C**-0.5 is folded into the query block.
    scale = C ** (-0.5)
    wqkv = jnp.zeros((C, 3 * LANE), dtype=x.dtype)
    wqkv = wqkv.at[:, 0 * LANE:0 * LANE + H].set(w_key.T)
    wqkv = wqkv.at[:, 1 * LANE:1 * LANE + H].set(w_query.T * scale)
    wqkv = wqkv.at[:, 2 * LANE:2 * LANE + H].set(w_value.T)

    # Static block-diagonal causal additive bias: same batch element AND
    # col <= row within it. Large-negative (not -inf) => exp underflows to 0.
    row = np.arange(BT)[:, None]
    col = np.arange(BT)[None, :]
    allowed = ((row // T) == (col // T)) & ((col % T) <= (row % T))
    bias = jnp.asarray(np.where(allowed, 0.0, -1e30).astype(np.float32))

    # ---- grid-less pallas_call: whole problem in one invocation ----
    out_padded = pl.pallas_call(
        _head_kernel,
        out_shape=jax.ShapeDtypeStruct((BT, LANE), x.dtype),
        in_specs=[
            pl.BlockSpec(memory_space=pltpu.MemorySpace.VMEM),  # x slab
            pl.BlockSpec(memory_space=pltpu.MemorySpace.VMEM),  # fused Wqkv
            pl.BlockSpec(memory_space=pltpu.MemorySpace.VMEM),  # mask bias
        ],
        out_specs=pl.BlockSpec(memory_space=pltpu.MemorySpace.VMEM),
    )(x2d, wqkv, bias)

    return out_padded[:, :H].reshape(B, T, H)


def _reference(x, w_key, w_query, w_value):
    B, T, C = x.shape
    k = x @ w_key.T
    q = x @ w_query.T
    v = x @ w_value.T
    wei = (q @ jnp.swapaxes(k, -2, -1)) * (C ** -0.5)
    tril = jnp.tril(jnp.ones((T, T)))
    wei = jnp.where(tril == 0, -jnp.inf, wei)
    wei = jax.nn.softmax(wei, axis=-1)
    return wei @ v


if __name__ == "__main__":
    key = jax.random.PRNGKey(0)
    kx, kk, kq, kv = jax.random.split(key, 4)

    B, T, C, H = 2, BLOCK_SIZE, N_EMBD, HEAD_SIZE

    x = jax.random.normal(kx, (B, T, C), dtype=jnp.float32)
    # deterministic nn.Linear-style init: U(-1/sqrt(C), 1/sqrt(C))
    bound = 1.0 / (C ** 0.5)
    w_key = jax.random.uniform(kk, (H, C), jnp.float32, -bound, bound)
    w_query = jax.random.uniform(kq, (H, C), jnp.float32, -bound, bound)
    w_value = jax.random.uniform(kv, (H, C), jnp.float32, -bound, bound)

    out = megatron_head_forward(x, w_key, w_query, w_value)
    out = jax.block_until_ready(out)

    ref = _reference(x, w_key, w_query, w_value)
    assert out.shape == (B, T, H)
    assert jnp.allclose(out, ref, atol=1e-5, rtol=1e-5), "mismatch vs reference"

    print("KERNEL_OK")
</pallas_src>

<mosaic_0001>
module attributes {stable_mosaic.version = 11 : i64} {
  func.func @_head_kernel(%arg0: memref<16x32xf32, #tpu.memory_space<vmem>>, %arg1: memref<32x384xf32, #tpu.memory_space<vmem>>, %arg2: memref<16x16xf32, #tpu.memory_space<vmem>>, %arg3: memref<16x128xf32, #tpu.memory_space<vmem>>) attributes {dimension_semantics = [], scalar_prefetch = 0 : i64, scratch_operands = 0 : i64, tpu.core_type = #tpu.core_type<tc>} {
    %c0 = arith.constant 0 : index
    %c0_0 = arith.constant 0 : index
    %0 = vector.load %arg0[%c0, %c0_0] : memref<16x32xf32, #tpu.memory_space<vmem>>, vector<16x32xf32>
    %c0_1 = arith.constant 0 : index
    %c0_2 = arith.constant 0 : index
    %1 = vector.load %arg1[%c0_1, %c0_2] : memref<32x384xf32, #tpu.memory_space<vmem>>, vector<32x384xf32>
    %cst = arith.constant dense<0.000000e+00> : vector<16x384xf32>
    %2 = tpu.matmul %0, %1, %cst {dimension_numbers = #tpu.dot_dimension_numbers<[1], [0], [0], [1], [0, 0, 1, 1], [], []>} : vector<16x32xf32>, vector<32x384xf32>, vector<16x384xf32> -> vector<16x384xf32>
    %3 = vector.extract_strided_slice %2 {offsets = [0, 0], sizes = [16, 128], strides = [1, 1]} : vector<16x384xf32> to vector<16x128xf32>
    %4 = vector.extract_strided_slice %2 {offsets = [0, 128], sizes = [16, 128], strides = [1, 1]} : vector<16x384xf32> to vector<16x128xf32>
    %5 = vector.extract_strided_slice %2 {offsets = [0, 256], sizes = [16, 128], strides = [1, 1]} : vector<16x384xf32> to vector<16x128xf32>
    %cst_3 = arith.constant dense<0.000000e+00> : vector<16x16xf32>
    %6 = tpu.matmul %4, %3, %cst_3 {dimension_numbers = #tpu.dot_dimension_numbers<[1], [1], [0], [0], [0, 0, 1, 0], [], []>} : vector<16x128xf32>, vector<16x128xf32>, vector<16x16xf32> -> vector<16x16xf32>
    %c0_4 = arith.constant 0 : index
    %c0_5 = arith.constant 0 : index
    %7 = vector.load %arg2[%c0_4, %c0_5] : memref<16x16xf32, #tpu.memory_space<vmem>>, vector<16x16xf32>
    %8 = arith.addf %6, %7 : vector<16x16xf32>
    %cst_6 = arith.constant dense<0xFF800000> : vector<16xf32>
    %9 = vector.multi_reduction <maximumf>, %8, %cst_6 [1] : vector<16x16xf32> to vector<16xf32>
    %10 = vector.shape_cast %9 : vector<16xf32> to vector<16x1xf32>
    %11 = vector.broadcast %10 : vector<16x1xf32> to vector<16x16xf32>
    %12 = arith.subf %8, %11 : vector<16x16xf32>
    %13 = math.exp %12 : vector<16x16xf32>
    %cst_7 = arith.constant dense<0.000000e+00> : vector<16xf32>
    %14 = vector.multi_reduction <add>, %13, %cst_7 [1] : vector<16x16xf32> to vector<16xf32>
    %15 = vector.shape_cast %14 : vector<16xf32> to vector<16x1xf32>
    %16 = vector.broadcast %15 : vector<16x1xf32> to vector<16x16xf32>
    %17 = arith.divf %13, %16 : vector<16x16xf32>
    %cst_8 = arith.constant dense<0.000000e+00> : vector<16x128xf32>
    %18 = tpu.matmul %17, %5, %cst_8 {dimension_numbers = #tpu.dot_dimension_numbers<[1], [0], [0], [1], [0, 0, 1, 1], [], []>} : vector<16x16xf32>, vector<16x128xf32>, vector<16x128xf32> -> vector<16x128xf32>
    %c0_9 = arith.constant 0 : index
    %c0_10 = arith.constant 0 : index
    %19 = vector.load %arg3[%c0_9, %c0_10] : memref<16x128xf32, #tpu.memory_space<vmem>>, vector<16x128xf32>
    tpu.vector_store %arg3[%c0_9, %c0_10], %18 {strides = array<i32>} : memref<16x128xf32, #tpu.memory_space<vmem>>, vector<16x128xf32>,
    return
  }
}

</mosaic_0001>

<llo_original>
// kernel: tpu_custom_call.1
$region0: #{tpu_custom_call.1}
  #allocation0 [shape = 'u32[]', space=smem, size = 0x4, offset = 0x4, fixed_abs, tag = 'smem constant byte address 0x4 - core index']
  #allocation1 [shape = 'u32[144,128]{1,0:T(1,128)}', space=vmem, size = 0x12000, scoped, tag = 'internal scratch']
  %s0 = inlined_call_operand.hbm [shape: f32[16,32], index: 0, kind: input, shape index: {}]
  %s1 = inlined_call_operand.hbm [shape: f32[32,384], index: 1, kind: input, shape index: {}]
  %s2 = inlined_call_operand.hbm [shape: f32[16,16], index: 2, kind: input, shape index: {}]
  %s3 = inlined_call_operand.hbm [shape: f32[16,128], index: 3, kind: output, shape index: {}]
  %s4 = sld [smem:[#allocation0]]
  $region34: #{tpu_custom_call.1} parent=0
    _
  %s6 = ssub.s32 1, %s4
  %s7 = scalar_select 0, %s6, %s4
  $region1: #{tpu_custom_call.1} parent=0
    #allocation2 [shape = 'u8[8192]{0}', space=vmem, size = 0x2000, scoped, tag = 'input window, operand 0, single buffered']
    #allocation3 [shape = 's32[1]{0}', space=sflag, size = 0x4, scoped, tag = 'scoped memory for tpu_custom_call.1']
    #allocation4 [shape = 's32[1]{0}', space=sflag, size = 0x4, scoped, tag = 'scoped memory for tpu_custom_call.1']
    #allocation5 [shape = 'u8[49152]{0}', space=vmem, size = 0xc000, scoped, tag = 'input window, operand 1, single buffered']
    #allocation6 [shape = 's32[1]{0}', space=sflag, size = 0x4, scoped, tag = 'scoped memory for tpu_custom_call.1']
    #allocation7 [shape = 'u8[8192]{0}', space=vmem, size = 0x2000, scoped, tag = 'input window, operand 2, single buffered']
    #allocation8 [shape = 'u8[8192]{0}', space=vmem, size = 0x2000, scoped, tag = 'output window, operand 0, single buffered']
    %8 = vsyncpa [#allocation3], 0
    %9 = vsyncpa [#allocation6], 0
    %10 = vsyncpa [#allocation4], 0
    // Predicated region
    $region2: #{tpu_custom_call.1} parent=1 // pred_check
      _
    $region3: #{tpu_custom_call.1} parent=1 // pred_check_branch
      %12 = sbr.rel (0) target = $region5
    $region4: #{tpu_custom_call.1} parent=1 // pred_region
      %s14 = ssub.s32 256, 256
      %15 = vsyncadd [#allocation3], %s14
      %s16 = sshll.u32 [#allocation2], 4
      %s17 = int_to_ptr.vmem [resolvable:$true] %s16
      %22 = dma.hbm_to_vmem [thread:$0]  %s0, 256, %s17, [#allocation3], 128, 128, 8
    $region5: #{tpu_custom_call.1} parent=1 // pred_fallthru
      _
    // Predicated region
    $region6: #{tpu_custom_call.1} parent=1 // pred_check
      _
    $region7: #{tpu_custom_call.1} parent=1 // pred_check_branch
      %24 = sbr.rel (0) target = $region9
    $region8: #{tpu_custom_call.1} parent=1 // pred_region
      %s26 = ssub.s32 1536, 1536
      %27 = vsyncadd [#allocation6], %s26
      %s28 = sshll.u32 [#allocation5], 4
      %s29 = int_to_ptr.vmem [resolvable:$true] %s28
      %34 = dma.hbm_to_vmem [thread:$0]  %s1, 1536, %s29, [#allocation6], 384, 384, 24
    $region9: #{tpu_custom_call.1} parent=1 // pred_fallthru
      _
    // Predicated region
    $region10: #{tpu_custom_call.1} parent=1 // pred_check
      _
    $region11: #{tpu_custom_call.1} parent=1 // pred_check_branch
      %36 = sbr.rel (0) target = $region13
    $region12: #{tpu_custom_call.1} parent=1 // pred_region
      %s38 = ssub.s32 256, 256
      %39 = vsyncadd [#allocation6], %s38
      %s40 = sshll.u32 [#allocation7], 4
      %s41 = int_to_ptr.vmem [resolvable:$true] %s40
      %46 = dma.hbm_to_vmem [thread:$0]  %s2, 256, %s41, [#allocation6], 128, 128, 8
    $region13: #{tpu_custom_call.1} parent=1 // pred_fallthru
      _
    // Predicated region
    $region14: #{tpu_custom_call.1} parent=1 // pred_check
      _
    $region15: #{tpu_custom_call.1} parent=1 // pred_check_branch
      %48 = sbr.rel (0) target = $region17
    $region16: #{tpu_custom_call.1} parent=1 // pred_region
      %49 = dma.done [#allocation3], 256
    $region17: #{tpu_custom_call.1} parent=1 // pred_fallthru
      _
    // Predicated region
    $region18: #{tpu_custom_call.1} parent=1 // pred_check
      _
    $region19: #{tpu_custom_call.1} parent=1 // pred_check_branch
      %51 = sbr.rel (0) target = $region21
    $region20: #{tpu_custom_call.1} parent=1 // pred_region
      %52 = dma.done [#allocation6], 1536
    $region21: #{tpu_custom_call.1} parent=1 // pred_fallthru
      _
    // Predicated region
    $region22: #{tpu_custom_call.1} parent=1 // pred_check
      _
    $region23: #{tpu_custom_call.1} parent=1 // pred_check_branch
      %54 = sbr.rel (0) target = $region25
    $region24: #{tpu_custom_call.1} parent=1 // pred_region
      %55 = dma.done [#allocation6], 256
    $region25: #{tpu_custom_call.1} parent=1 // pred_fallthru
      _
    %v56 = vld [vmem:[#allocation2] sm:$0xff]
    %v57 = vld [vmem:[#allocation2 + $0x8] sm:$0xff]
    %v58 = vld [vmem:[#allocation5] sm:$0xff]
    %v59 = vld [vmem:[#allocation5 + $0x8] sm:$0xff]
    %v60 = vld [vmem:[#allocation5 + $0x10] sm:$0xff]
    %v61 = vld [vmem:[#allocation5 + $0x18] sm:$0xff]
    %v62 = vld [vmem:[#allocation5 + $0x20] sm:$0xff]
    %v63 = vld [vmem:[#allocation5 + $0x28] sm:$0xff]
    %v64 = vld [vmem:[#allocation5 + $0x30] sm:$0xff]
    %v65 = vld [vmem:[#allocation5 + $0x38] sm:$0xff]
    %v66 = vld [vmem:[#allocation5 + $0x40] sm:$0xff]
    %v67 = vld [vmem:[#allocation5 + $0x48] sm:$0xff]
    %v68 = vld [vmem:[#allocation5 + $0x50] sm:$0xff]
    %v69 = vld [vmem:[#allocation5 + $0x58] sm:$0xff]
    %vm70 = vcmask 261120
    %v72 = vsel %vm70, %v56, 0
    %v75 = vsel %vm70, %v57, 0
    %77 = vmatprep.subr.mxu0 0.0
    %78 = vmatpush1.msra.mxu0 0.0
    %79 = vmatprep.subr.mxu0 0.0
    %80 = vmatpush1.msra.mxu0 0.0
    %81 = vmatprep.subr.mxu0 0.0
    %82 = vmatpush1.msra.mxu0 0.0
    %83 = vmatprep.subr.mxu0 0.0
    %84 = vmatpush1.msra.mxu0 0.0
    %85 = vmatprep.subr.mxu0 0.0
    %86 = vmatpush1.msra.mxu0 0.0
    %87 = vmatprep.subr.mxu0 0.0
    %88 = vmatpush1.msra.mxu0 0.0
    %89 = vmatprep.subr.mxu0 0.0
    %90 = vmatpush1.msra.mxu0 0.0
    %91 = vmatprep.subr.mxu0 0.0
    %92 = vmatpush1.msra.mxu0 0.0
    %93 = vmatprep.subr.mxu0 0.0
    %94 = vmatpush1.msra.mxu0 0.0
    %95 = vmatprep.subr.mxu0 0.0
    %96 = vmatpush1.msra.mxu0 0.0
    %97 = vmatprep.subr.mxu0 0.0
    %98 = vmatpush1.msra.mxu0 0.0
    %99 = vmatprep.subr.mxu0 0.0
    %100 = vmatpush1.msra.mxu0 0.0
    %101 = vmatprep.subr.mxu0 %v68
    %102 = vmatpush1.msra.mxu0 %v67
    %103 = vmatprep.subr.mxu0 %v65
    %104 = vmatpush1.msra.mxu0 %v64
    %105 = vmatprep.subr.mxu0 %v62
    %106 = vmatpush1.msra.mxu0 %v61
    %107 = vmatprep.subr.mxu0 %v59
    %108 = vmatpush1.msra.mxu0 %v58
    %109 = vmatprep.subr.mxu0 0.0
    %110 = vmatpush2.msra.mxu0 0.0
    %111 = vmatprep.subr.mxu0 0.0
    %112 = vmatpush2.msra.mxu0 0.0
    %113 = vmatprep.subr.mxu0 0.0
    %114 = vmatpush2.msra.mxu0 0.0
    %115 = vmatprep.subr.mxu0 0.0
    %116 = vmatpush2.msra.mxu0 0.0
    %117 = vmatprep.subr.mxu0 0.0
    %118 = vmatpush2.msra.mxu0 0.0
    %119 = vmatprep.subr.mxu0 0.0
    %120 = vmatpush2.msra.mxu0 0.0
    %121 = vmatprep.subr.mxu0 0.0
    %122 = vmatpush2.msra.mxu0 0.0
    %123 = vmatprep.subr.mxu0 0.0
    %124 = vmatpush2.msra.mxu0 0.0
    %125 = vmatprep.subr.mxu0 0.0
    %126 = vmatpush2.msra.mxu0 0.0
    %127 = vmatprep.subr.mxu0 0.0
    %128 = vmatpush2.msra.mxu0 0.0
    %129 = vmatprep.subr.mxu0 0.0
    %130 = vmatpush2.msra.mxu0 0.0
    %131 = vmatprep.subr.mxu0 0.0
    %132 = vmatpush2.msra.mxu0 0.0
    %133 = vmatprep.subr.mxu0 0.0
    %134 = vmatpush2.msra.mxu0 0.0
    %135 = vmatprep.subr.mxu0 0.0
    %136 = vmatpush2.msra.mxu0 0.0
    %137 = vmatprep.subr.mxu0 0.0
    %138 = vmatpush2.msra.mxu0 0.0
    %139 = vmatprep.subr.mxu0 0.0
    %140 = vmatpush2.msra.mxu0 0.0
    %141 = vmatprep.mubr.f32.mxu0 0.0
    %142 = vmatmul.mubr.f32.gmra.mxu0 %v72
    %v143 = vpop.f32.mrf.mxu0
    %v144 = vadd.f32 0.0, %v143
    %v145 = vpop.f32.mrf.mxu0
    %v146 = vadd.f32 0.0, %v145
    %147 = vmatprep.mubr.f32.mxu0 0.0
    %148 = vmatmul.mubr.f32.gmra.mxu0 %v75
    %v149 = vpop.f32.mrf.mxu0
    %v150 = vadd.f32 0.0, %v149
    %v151 = vpop.f32.mrf.mxu0
    %v152 = vadd.f32 0.0, %v151
    %153 = vdwg.mxu0
    %154 = vmatprep.subr.mxu0 0.0
    %155 = vmatpush1.msra.mxu0 0.0
    %156 = vmatprep.subr.mxu0 0.0
    %157 = vmatpush1.msra.mxu0 0.0
    %158 = vmatprep.subr.mxu0 0.0
    %159 = vmatpush1.msra.mxu0 0.0
    %160 = vmatprep.subr.mxu0 0.0
    %161 = vmatpush1.msra.mxu0 0.0
    %162 = vmatprep.subr.mxu0 0.0
    %163 = vmatpush1.msra.mxu0 0.0
    %164 = vmatprep.subr.mxu0 0.0
    %165 = vmatpush1.msra.mxu0 0.0
    %166 = vmatprep.subr.mxu0 0.0
    %167 = vmatpush1.msra.mxu0 0.0
    %168 = vmatprep.subr.mxu0 0.0
    %169 = vmatpush1.msra.mxu0 0.0
    %170 = vmatprep.subr.mxu0 0.0
    %171 = vmatpush1.msra.mxu0 0.0
    %172 = vmatprep.subr.mxu0 0.0
    %173 = vmatpush1.msra.mxu0 0.0
    %174 = vmatprep.subr.mxu0 0.0
    %175 = vmatpush1.msra.mxu0 0.0
    %176 = vmatprep.subr.mxu0 0.0
    %177 = vmatpush1.msra.mxu0 0.0
    %178 = vmatprep.subr.mxu0 0.0
    %179 = vmatpush1.msra.mxu0 %v69
    %180 = vmatprep.subr.mxu0 0.0
    %181 = vmatpush1.msra.mxu0 %v66
    %182 = vmatprep.subr.mxu0 0.0
    %183 = vmatpush1.msra.mxu0 %v63
    %184 = vmatprep.subr.mxu0 0.0
    %185 = vmatpush1.msra.mxu0 %v60
    %186 = vmatprep.subr.mxu0 0.0
    %187 = vmatpush2.msra.mxu0 0.0
    %188 = vmatprep.subr.mxu0 0.0
    %189 = vmatpush2.msra.mxu0 0.0
    %190 = vmatprep.subr.mxu0 0.0
    %191 = vmatpush2.msra.mxu0 0.0
    %192 = vmatprep.subr.mxu0 0.0
    %193 = vmatpush2.msra.mxu0 0.0
    %194 = vmatprep.subr.mxu0 0.0
    %195 = vmatpush2.msra.mxu0 0.0
    %196 = vmatprep.subr.mxu0 0.0
    %197 = vmatpush2.msra.mxu0 0.0
    %198 = vmatprep.subr.mxu0 0.0
    %199 = vmatpush2.msra.mxu0 0.0
    %200 = vmatprep.subr.mxu0 0.0
    %201 = vmatpush2.msra.mxu0 0.0
    %202 = vmatprep.subr.mxu0 0.0
    %203 = vmatpush2.msra.mxu0 0.0
    %204 = vmatprep.subr.mxu0 0.0
    %205 = vmatpush2.msra.mxu0 0.0
    %206 = vmatprep.subr.mxu0 0.0
    %207 = vmatpush2.msra.mxu0 0.0
    %208 = vmatprep.subr.mxu0 0.0
    %209 = vmatpush2.msra.mxu0 0.0
    %210 = vmatprep.subr.mxu0 0.0
    %211 = vmatpush2.msra.mxu0 0.0
    %212 = vmatprep.subr.mxu0 0.0
    %213 = vmatpush2.msra.mxu0 0.0
    %214 = vmatprep.subr.mxu0 0.0
    %215 = vmatpush2.msra.mxu0 0.0
    %216 = vmatprep.subr.mxu0 0.0
    %217 = vmatpush2.msra.mxu0 0.0
    %218 = vmatprep.mubr.f32.mxu0 0.0
    %219 = vmatmul.mubr.f32.gmra.mxu0 %v72
    %v220 = vpop.f32.mrf.mxu0
    %v221 = vadd.f32 0.0, %v220
    %v222 = vpop.f32.mrf.mxu0
    %223 = vmatprep.mubr.f32.mxu0 0.0
    %224 = vmatmul.mubr.f32.gmra.mxu0 %v75
    %v225 = vpop.f32.mrf.mxu0
    %v226 = vadd.f32 0.0, %v225
    %v227 = vpop.f32.mrf.mxu0
    %228 = vdwg.mxu0
    %v229 = vld [vmem:[#allocation7] sm:$0xff]
    %v230 = vld [vmem:[#allocation7 + $0x8] sm:$0xff]
    %231 = vmatprep.subr.mxu0 0.0
    %232 = vmatpush1.xpose.msra.mxu0 0.0
    %233 = vmatprep.subr.mxu0 0.0
    %234 = vmatpush1.xpose.msra.mxu0 0.0
    %235 = vmatprep.subr.mxu0 0.0
    %236 = vmatpush1.xpose.msra.mxu0 0.0
    %237 = vmatprep.subr.mxu0 0.0
    %238 = vmatpush1.xpose.msra.mxu0 0.0
    %239 = vmatprep.subr.mxu0 0.0
    %240 = vmatpush1.xpose.msra.mxu0 0.0
    %241 = vmatprep.subr.mxu0 0.0
    %242 = vmatpush1.xpose.msra.mxu0 0.0
    %243 = vmatprep.subr.mxu0 0.0
    %244 = vmatpush1.xpose.msra.mxu0 0.0
    %245 = vmatprep.subr.mxu0 0.0
    %246 = vmatpush1.xpose.msra.mxu0 0.0
    %247 = vmatprep.subr.mxu0 0.0
    %248 = vmatpush1.xpose.msra.mxu0 0.0
    %249 = vmatprep.subr.mxu0 0.0
    %250 = vmatpush1.xpose.msra.mxu0 0.0
    %251 = vmatprep.subr.mxu0 0.0
    %252 = vmatpush1.xpose.msra.mxu0 0.0
    %253 = vmatprep.subr.mxu0 0.0
    %254 = vmatpush1.xpose.msra.mxu0 0.0
    %255 = vmatprep.subr.mxu0 0.0
    %256 = vmatpush1.xpose.msra.mxu0 0.0
    %257 = vmatprep.subr.mxu0 0.0
    %258 = vmatpush1.xpose.msra.mxu0 0.0
    %259 = vmatprep.subr.mxu0 0.0
    %260 = vmatpush1.xpose.msra.mxu0 %v150
    %261 = vmatprep.subr.mxu0 0.0
    %262 = vmatpush1.xpose.msra.mxu0 %v144
    %263 = vmatprep.subr.mxu0 0.0
    %264 = vmatpush2.xpose.msra.mxu0 0.0
    %265 = vmatprep.subr.mxu0 0.0
    %266 = vmatpush2.xpose.msra.mxu0 0.0
    %267 = vmatprep.subr.mxu0 0.0
    %268 = vmatpush2.xpose.msra.mxu0 0.0
    %269 = vmatprep.subr.mxu0 0.0
    %270 = vmatpush2.xpose.msra.mxu0 0.0
    %271 = vmatprep.subr.mxu0 0.0
    %272 = vmatpush2.xpose.msra.mxu0 0.0
    %273 = vmatprep.subr.mxu0 0.0
    %274 = vmatpush2.xpose.msra.mxu0 0.0
    %275 = vmatprep.subr.mxu0 0.0
    %276 = vmatpush2.xpose.msra.mxu0 0.0
    %277 = vmatprep.subr.mxu0 0.0
    %278 = vmatpush2.xpose.msra.mxu0 0.0
    %279 = vmatprep.subr.mxu0 0.0
    %280 = vmatpush2.xpose.msra.mxu0 0.0
    %281 = vmatprep.subr.mxu0 0.0
    %282 = vmatpush2.xpose.msra.mxu0 0.0
    %283 = vmatprep.subr.mxu0 0.0
    %284 = vmatpush2.xpose.msra.mxu0 0.0
    %285 = vmatprep.subr.mxu0 0.0
    %286 = vmatpush2.xpose.msra.mxu0 0.0
    %287 = vmatprep.subr.mxu0 0.0
    %288 = vmatpush2.xpose.msra.mxu0 0.0
    %289 = vmatprep.subr.mxu0 0.0
    %290 = vmatpush2.xpose.msra.mxu0 0.0
    %291 = vmatprep.subr.mxu0 0.0
    %292 = vmatpush2.xpose.msra.mxu0 0.0
    %293 = vmatprep.subr.mxu0 0.0
    %294 = vmatpush2.xpose.msra.mxu0 0.0
    %295 = vmatprep.mubr.f32.mxu0 0.0
    %296 = vmatmul.mubr.f32.gmra.mxu0 %v146
    %v297 = vpop.f32.mrf.mxu0
    %v298 = vadd.f32 %v229, %v297
    %v299 = vpop.f32.mrf.mxu0
    %300 = vmatprep.mubr.f32.mxu0 0.0
    %301 = vmatmul.mubr.f32.gmra.mxu0 %v152
    %v302 = vpop.f32.mrf.mxu0
    %v303 = vadd.f32 %v230, %v302
    %v304 = vpop.f32.mrf.mxu0
    %305 = vdwg.mxu0
    %vm306 = vcmask 130048
    %v307 = vsel %vm306, %v298, -inf
    %308 = vmax.xlane.f32.xlu0 %v307
    %v309 = vpop.xlane.xlu0 %308
    %v310 = vsel %vm306, %v303, -inf
    %311 = vmax.xlane.f32.xlu0 %v310
    %v312 = vpop.xlane.xlu0 %311
    %v313 = vsub.f32 %v298, %v309
    %v314 = vsub.f32 %v303, %v312
    %v315 = vmul.f32 %v313, 1.442695
    %v316 = vpow.pop %v315
    %v317 = vmul.f32 %v314, 1.442695
    %v318 = vpow.pop %v317
    %v319 = vsel %vm306, %v316, 0.0
    %320 = vadd.xlane.f32.xlu0 %v319
    %v321 = vpop.xlane.xlu0 %320
    %v322 = vsel %vm306, %v318, 0.0
    %323 = vadd.xlane.f32.xlu0 %v322
    %v324 = vpop.xlane.xlu0 %323
    %v325 = vrcp.pop %v321
    %v326 = vmul.f32 %v316, %v325
    %v327 = vrcp.pop %v324
    %v328 = vmul.f32 %v318, %v327
    %v330 = vsel %vm306, %v326, 0
    %v333 = vsel %vm306, %v328, 0
    %335 = vmatprep.subr.mxu0 0.0
    %336 = vmatpush1.msra.mxu0 0.0
    %337 = vmatprep.subr.mxu0 0.0
    %338 = vmatpush1.msra.mxu0 0.0
    %339 = vmatprep.subr.mxu0 0.0
    %340 = vmatpush1.msra.mxu0 0.0
    %341 = vmatprep.subr.mxu0 0.0
    %342 = vmatpush1.msra.mxu0 0.0
    %343 = vmatprep.subr.mxu0 0.0
    %344 = vmatpush1.msra.mxu0 0.0
    %345 = vmatprep.subr.mxu0 0.0
    %346 = vmatpush1.msra.mxu0 0.0
    %347 = vmatprep.subr.mxu0 0.0
    %348 = vmatpush1.msra.mxu0 0.0
    %349 = vmatprep.subr.mxu0 0.0
    %350 = vmatpush1.msra.mxu0 0.0
    %351 = vmatprep.subr.mxu0 0.0
    %352 = vmatpush1.msra.mxu0 0.0
    %353 = vmatprep.subr.mxu0 0.0
    %354 = vmatpush1.msra.mxu0 0.0
    %355 = vmatprep.subr.mxu0 0.0
    %356 = vmatpush1.msra.mxu0 0.0
    %357 = vmatprep.subr.mxu0 0.0
    %358 = vmatpush1.msra.mxu0 0.0
    %359 = vmatprep.subr.mxu0 0.0
    %360 = vmatpush1.msra.mxu0 0.0
    %361 = vmatprep.subr.mxu0 0.0
    %362 = vmatpush1.msra.mxu0 0.0
    %363 = vmatprep.subr.mxu0 0.0
    %364 = vmatpush1.msra.mxu0 %v226
    %365 = vmatprep.subr.mxu0 0.0
    %366 = vmatpush1.msra.mxu0 %v221
    %367 = vmatprep.subr.mxu0 0.0
    %368 = vmatpush2.msra.mxu0 0.0
    %369 = vmatprep.subr.mxu0 0.0
    %370 = vmatpush2.msra.mxu0 0.0
    %371 = vmatprep.subr.mxu0 0.0
    %372 = vmatpush2.msra.mxu0 0.0
    %373 = vmatprep.subr.mxu0 0.0
    %374 = vmatpush2.msra.mxu0 0.0
    %375 = vmatprep.subr.mxu0 0.0
    %376 = vmatpush2.msra.mxu0 0.0
    %377 = vmatprep.subr.mxu0 0.0
    %378 = vmatpush2.msra.mxu0 0.0
    %379 = vmatprep.subr.mxu0 0.0
    %380 = vmatpush2.msra.mxu0 0.0
    %381 = vmatprep.subr.mxu0 0.0
    %382 = vmatpush2.msra.mxu0 0.0
    %383 = vmatprep.subr.mxu0 0.0
    %384 = vmatpush2.msra.mxu0 0.0
    %385 = vmatprep.subr.mxu0 0.0
    %386 = vmatpush2.msra.mxu0 0.0
    %387 = vmatprep.subr.mxu0 0.0
    %388 = vmatpush2.msra.mxu0 0.0
    %389 = vmatprep.subr.mxu0 0.0
    %390 = vmatpush2.msra.mxu0 0.0
    %391 = vmatprep.subr.mxu0 0.0
    %392 = vmatpush2.msra.mxu0 0.0
    %393 = vmatprep.subr.mxu0 0.0
    %394 = vmatpush2.msra.mxu0 0.0
    %395 = vmatprep.subr.mxu0 0.0
    %396 = vmatpush2.msra.mxu0 0.0
    %397 = vmatprep.subr.mxu0 0.0
    %398 = vmatpush2.msra.mxu0 0.0
    %399 = vmatprep.mubr.f32.mxu0 0.0
    %400 = vmatmul.mubr.f32.gmra.mxu0 %v330
    %v401 = vpop.f32.mrf.mxu0
    %v402 = vadd.f32 0.0, %v401
    %v403 = vpop.f32.mrf.mxu0
    %404 = vmatprep.mubr.f32.mxu0 0.0
    %405 = vmatmul.mubr.f32.gmra.mxu0 %v333
    %v406 = vpop.f32.mrf.mxu0
    %v407 = vadd.f32 0.0, %v406
    %v408 = vpop.f32.mrf.mxu0
    %409 = vdwg.mxu0
    %410 = vst [vmem:[#allocation8] sm:$0xff] %v402
    %411 = vst [vmem:[#allocation8 + $0x8] sm:$0xff] %v407
    // Predicated region
    $region26: #{tpu_custom_call.1} parent=1 // pred_check
      _
    $region27: #{tpu_custom_call.1} parent=1 // pred_check_branch
      %413 = sbr.rel (0) target = $region29
    $region28: #{tpu_custom_call.1} parent=1 // pred_region
      %s415 = ssub.s32 256, 256
      %416 = vsyncadd [#allocation4], %s415
      %s417 = sshll.u32 [#allocation8], 4
      %s418 = int_to_ptr.vmem [resolvable:$true] %s417
      %423 = dma.vmem_to_hbm [thread:$0]  %s418, 256, %s3, [#allocation4], 128, 128, 8
    $region29: #{tpu_custom_call.1} parent=1 // pred_fallthru
      _
    // Predicated region
    $region30: #{tpu_custom_call.1} parent=1 // pred_check
      _
    $region31: #{tpu_custom_call.1} parent=1 // pred_check_branch
      %425 = sbr.rel (0) target = $region33
    $region32: #{tpu_custom_call.1} parent=1 // pred_region
      %426 = dma.done [#allocation4], 256
    $region33: #{tpu_custom_call.1} parent=1 // pred_fallthru
      _
    %427 = vsyncpa [#allocation3], 1
    %428 = vsyncpa [#allocation6], 1
    %429 = vsyncpa [#allocation4], 1

</llo_original>
